<compile_context>
chip_gen: v6e
topology: v6e:2x2x1
jax: 0.10.0
libtpu: 0.0.40
codegen_flags: <defaults>
</compile_context>

<pallas_src>
import jax
import jax.numpy as jnp
import numpy as np
from jax.experimental import pallas as pl
from jax.experimental.pallas import tpu as pltpu


def _round_up(x, m):
    return ((x + m - 1) // m) * m


_TM_CANDIDATES = (512, 384, 256, 128, 64)   # sublane axis: multiples of 8
_TK_CANDIDATES = (512, 384, 256, 128)       # lane axis: multiples of 128


def _pick_tm(n_pad, max_tile):
    """Largest row tile <= max_tile that divides n_pad while leaving >= 2 row
    tiles, so the 'parallel' grid axis feeds both v7x TensorCores."""
    for c in _TM_CANDIDATES:
        if c <= max_tile and n_pad % c == 0 and n_pad // c >= 2:
            return c
    return 64


def _pick_tk(n_pad, max_tile):
    """Largest contraction tile <= max_tile (multiple of 128) dividing n_pad."""
    for c in _TK_CANDIDATES:
        if c <= max_tile and n_pad % c == 0:
            return c
    return 128


# ---------------------------------------------------------------------------
# Stage 1: XW = inputs @ weight   (computed ONCE; f32 math, stored compute dtype)
# ---------------------------------------------------------------------------
def _xw_kernel(x_ref, w_ref, o_ref):
    # x_ref: (tm, D_in) row tile; w_ref: (D_in, D_out_p) weight.  The weight's
    # index_map is constant, so the pipeline fetches it from HBM only once.
    o_ref[...] = jnp.dot(
        x_ref[...], w_ref[...], preferred_element_type=jnp.float32
    ).astype(o_ref.dtype)


# ---------------------------------------------------------------------------
# Stage 2: out = adj @ XW   (row-tiled, k-tiled reduction, f32 accumulation
#                            directly in the output block)
# ---------------------------------------------------------------------------
def _make_aggregate_kernel(tk, xw_resident):
    """Build the stage-2 body.

    xw_resident=True  -> xw_ref holds the full (N_pad, D_out_p) XW in VMEM
                         (single HBM read); the k-chunk is sliced in-kernel.
    xw_resident=False -> xw_ref is the streamed (tk, D_out_p) k-tile (fallback
                         when the resident copy would not fit the VMEM budget).
    """

    def kernel(adj_ref, xw_ref, o_ref):
        k = pl.program_id(1)

        # o_ref's block index is constant across k, so it stays VMEM-resident:
        # zero it on the first reduction step and accumulate directly (no
        # scratch accumulator, no epilogue copy).
        @pl.when(k == 0)
        def _():
            o_ref[...] = jnp.zeros_like(o_ref)

        if xw_resident:
            start = pl.multiple_of(k * tk, tk)
            xw_blk = xw_ref[pl.ds(start, tk), :]
        else:
            xw_blk = xw_ref[...]

        o_ref[...] += jnp.dot(adj_ref[...], xw_blk,
                              preferred_element_type=jnp.float32)
        # NOTE: the torch module computes relu(x) but RETURNS the
        # pre-activation x, so no activation is applied here.

    return kernel


def graph_conv_sparse(inputs, weight, adj, *, max_tile=512,
                      compute_dtype=jnp.bfloat16,
                      xw_vmem_budget_bytes=40 * 1024 * 1024):
    """out = adj @ (inputs @ weight) with Pallas TPU kernels (pre-activation,
    matching the torch module's return value).

    max_tile: upper bound on the stage-2 adj tiles (tm, tk).  512 is a good
        default on v5e / v6e / v7x: stage 2 is HBM / step-overhead bound and
        per-step VMEM stays in the low-MiB range.
    compute_dtype: dtype of adj / XW fed to the MXU (accumulation is always
        f32).  bf16 halves the dominant N^2 HBM read.  On v7x an fp8 dtype can
        halve it again (inference only; ~5% adj quantization error).  For
        tighter-accuracy consumers keep XW in f32 - nearly free once resident.
    xw_vmem_budget_bytes: cap on the VMEM taken by the (double-buffered)
        resident XW block in stage 2; above it we fall back to streaming
        (tk, D_out) k-tiles.  40 MiB keeps stage 2 under v7x's 64 MiB VMEM.
    """
    N, D_in = inputs.shape
    assert weight.shape[0] == D_in
    D_out = weight.shape[1]
    assert adj.shape == (N, N)

    # Pad N only to 128 alignment (NOT to a multiple of the big tile, which
    # would inflate the N^2 traffic quadratically) and the feature dim to a
    # lane-dense multiple of 128.  Zero rows/cols are mathematically inert.
    N_pad = _round_up(N, 128)
    D_out_p = _round_up(D_out, 128)

    tm = _pick_tm(N_pad, max_tile)
    tk = _pick_tk(N_pad, max_tile)
    n_m = N_pad // tm
    n_k = N_pad // tk

    c_bytes = np.dtype(compute_dtype).itemsize

    # Host-side prep: cast adj to the compute dtype BEFORE padding so no
    # N_pad^2 f32 intermediate is ever materialized.
    adj_p = jnp.pad(adj.astype(compute_dtype),
                    ((0, N_pad - N), (0, N_pad - N)))
    x_p = jnp.pad(inputs.astype(jnp.float32), ((0, N_pad - N), (0, 0)))
    w_p = jnp.pad(weight.astype(jnp.float32), ((0, 0), (0, D_out_p - D_out)))

    # ---- Stage 1: XW (once; f32 math, stored in compute_dtype) -------------
    xw = pl.pallas_call(
        _xw_kernel,
        out_shape=jax.ShapeDtypeStruct((N_pad, D_out_p), compute_dtype),
        grid_spec=pltpu.PrefetchScalarGridSpec(
            num_scalar_prefetch=0,
            grid=(n_m,),
            in_specs=[
                pl.BlockSpec((tm, D_in), lambda i: (i, 0)),       # input rows
                pl.BlockSpec((D_in, D_out_p), lambda i: (0, 0)),  # weight, constant index => single HBM read
            ],
            out_specs=pl.BlockSpec((tm, D_out_p), lambda i: (i, 0)),
        ),
        compiler_params=pltpu.CompilerParams(
            dimension_semantics=("parallel",)),
        cost_estimate=pl.CostEstimate(
            flops=2 * N_pad * D_in * D_out_p,
            transcendentals=0,
            bytes_accessed=(N_pad * D_in * 4 + D_in * D_out_p * 4
                            + N_pad * D_out_p * c_bytes)),
    )(x_p, w_p)

    # ---- Stage 2: out = adj @ XW --------------------------------------------
    # Resident XW (constant block index => one HBM read, one VMEM copy per
    # TensorCore) when the double-buffered footprint fits the budget; otherwise
    # stream (tk, D_out_p) k-tiles.
    xw_buf_bytes = 2 * N_pad * D_out_p * c_bytes   # default double-buffering
    xw_resident = xw_buf_bytes <= xw_vmem_budget_bytes

    if xw_resident:
        xw_spec = pl.BlockSpec((N_pad, D_out_p), lambda i, k: (0, 0))
    else:
        xw_spec = pl.BlockSpec((tk, D_out_p), lambda i, k: (k, 0))
    xw_hbm_reads = 1 if xw_resident else n_m

    out_p = pl.pallas_call(
        _make_aggregate_kernel(tk, xw_resident),
        out_shape=jax.ShapeDtypeStruct((N_pad, D_out_p), jnp.float32),
        grid_spec=pltpu.PrefetchScalarGridSpec(
            num_scalar_prefetch=0,
            grid=(n_m, n_k),                               # reduction axis last
            in_specs=[
                pl.BlockSpec((tm, tk), lambda i, k: (i, k)),   # adj tile
                xw_spec,                                       # XW (resident or k-tile)
            ],
            out_specs=pl.BlockSpec((tm, D_out_p), lambda i, k: (i, 0)),
        ),
        compiler_params=pltpu.CompilerParams(
            # Row axis parallel (v7x megacore; tm picked so n_m >= 2), k axis
            # is the reduction.  48 MiB: above the 32 MiB scoped default but
            # below v7x's 64 MiB physical VMEM (v5e/v6e have 128 MiB).
            dimension_semantics=("parallel", "arbitrary"),
            vmem_limit_bytes=48 * 1024 * 1024),
        cost_estimate=pl.CostEstimate(
            flops=2 * N_pad * N_pad * D_out_p,
            transcendentals=0,
            bytes_accessed=(N_pad * N_pad * c_bytes
                            + xw_hbm_reads * N_pad * D_out_p * c_bytes
                            + N_pad * D_out_p * 4)),
    )(adj_p, xw)

    # Strip padding back to the logical shape.
    return out_p[:N, :D_out]


def glorot_init(key, input_dim, output_dim):
    init_range = np.sqrt(6.0 / (input_dim + output_dim))
    return jax.random.uniform(
        key, (input_dim, output_dim), dtype=jnp.float32,
        minval=-init_range, maxval=init_range,
    )


def _make_case(key, n, d_in, d_out):
    """Deterministic node features, glorot weight and GAE-style normalized adj."""
    k_w, k_x, k_a = jax.random.split(key, 3)
    weight = glorot_init(k_w, d_in, d_out)
    x = jax.random.normal(k_x, (n, d_in), dtype=jnp.float32)
    a = (jax.random.uniform(k_a, (n, n)) < 0.1).astype(jnp.float32)
    a = jnp.maximum(a, a.T) + jnp.eye(n, dtype=jnp.float32)      # symmetrize + self loops
    deg_inv_sqrt = 1.0 / jnp.sqrt(a.sum(axis=1))
    adj = a * deg_inv_sqrt[:, None] * deg_inv_sqrt[None, :]      # D^-1/2 A D^-1/2
    return x, weight, adj


if __name__ == "__main__":
    root = jax.random.PRNGKey(0)
    key1, key2, key3 = jax.random.split(root, 3)

    # Case 1: tiny graph (default tiles; resident-XW path; tm=64 so the
    # "parallel" row axis still has 2 tiles for v7x megacore).
    x, w, adj = _make_case(key1, 64, 32, 32)
    out = jax.block_until_ready(graph_conv_sparse(x, w, adj))
    ref = adj @ (x @ w)
    np.testing.assert_allclose(np.asarray(out), np.asarray(ref),
                               rtol=2e-2, atol=2e-2)

    # Case 2: non-tile-multiple N with a smaller max_tile so the reduction axis
    # has multiple steps (exercises zero-init + in-place accumulation and the
    # in-kernel pl.ds slicing of the resident XW).
    x, w, adj = _make_case(key2, 200, 48, 40)
    out = jax.block_until_ready(graph_conv_sparse(x, w, adj, max_tile=128))
    ref = adj @ (x @ w)
    np.testing.assert_allclose(np.asarray(out), np.asarray(ref),
                               rtol=2e-2, atol=2e-2)

    # Case 3: force the streamed-XW fallback path (zero VMEM budget).
    x, w, adj = _make_case(key3, 200, 48, 40)
    out = jax.block_until_ready(
        graph_conv_sparse(x, w, adj, max_tile=128, xw_vmem_budget_bytes=0))
    ref = adj @ (x @ w)
    np.testing.assert_allclose(np.asarray(out), np.asarray(ref),
                               rtol=2e-2, atol=2e-2)

    print("KERNEL_OK")
</pallas_src>

<mosaic_0001>
module attributes {stable_mosaic.version = 11 : i64} {
  func.func @_xw_kernel(%arg0: i32, %arg1: memref<64x32xf32, #tpu.memory_space<vmem>>, %arg2: memref<32x128xf32, #tpu.memory_space<vmem>>, %arg3: memref<64x128xbf16, #tpu.memory_space<vmem>>) attributes {dimension_semantics = [#tpu.dimension_semantics<parallel>], iteration_bounds = array<i64: 2>, scalar_prefetch = 0 : i64, scratch_operands = 0 : i64, tpu.core_type = #tpu.core_type<tc>, window_params = [{transform_indices = @transform_0, window_bounds = array<i64: 64, 32>}, {pipeline_mode = #tpu.pipeline_mode<synchronous>, transform_indices = @transform_1, window_bounds = array<i64: 32, 128>}, {transform_indices = @transform_2, window_bounds = array<i64: 64, 128>}]} {
    %c0 = arith.constant 0 : index
    %c0_0 = arith.constant 0 : index
    %0 = vector.load %arg1[%c0, %c0_0] : memref<64x32xf32, #tpu.memory_space<vmem>>, vector<64x32xf32>
    %c0_1 = arith.constant 0 : index
    %c0_2 = arith.constant 0 : index
    %1 = vector.load %arg2[%c0_1, %c0_2] : memref<32x128xf32, #tpu.memory_space<vmem>>, vector<32x128xf32>
    %cst = arith.constant dense<0.000000e+00> : vector<64x128xf32>
    %2 = tpu.matmul %0, %1, %cst {dimension_numbers = #tpu.dot_dimension_numbers<[1], [0], [0], [1], [0, 0, 1, 1], [], []>} : vector<64x32xf32>, vector<32x128xf32>, vector<64x128xf32> -> vector<64x128xf32>
    %3 = arith.truncf %2 : vector<64x128xf32> to vector<64x128xbf16>
    %c0_3 = arith.constant 0 : index
    %c0_4 = arith.constant 0 : index
    %4 = vector.load %arg3[%c0_3, %c0_4] : memref<64x128xbf16, #tpu.memory_space<vmem>>, vector<64x128xbf16>
    tpu.vector_store %arg3[%c0_3, %c0_4], %3 {strides = array<i32>} : memref<64x128xbf16, #tpu.memory_space<vmem>>, vector<64x128xbf16>,
    return
  }
  func.func @transform_0(%arg0: i32) -> (i32, i32) {
    %c0_i32 = arith.constant 0 : i32
    %c0_i32_0 = arith.constant 0 : i32
    return %arg0, %c0_i32 : i32, i32
  }
  func.func @transform_1(%arg0: i32) -> (i32, i32) {
    %c0_i32 = arith.constant 0 : i32
    %c0_i32_0 = arith.constant 0 : i32
    %c0_i32_1 = arith.constant 0 : i32
    return %c0_i32, %c0_i32_0 : i32, i32
  }
  func.func @transform_2(%arg0: i32) -> (i32, i32) {
    %c0_i32 = arith.constant 0 : i32
    %c0_i32_0 = arith.constant 0 : i32
    return %arg0, %c0_i32 : i32, i32
  }
}

</mosaic_0001>

<llo_original>
// kernel: tpu_custom_call.1
$region0: #{tpu_custom_call.1}
  #allocation0 [shape = 'u32[]', space=smem, size = 0x4, offset = 0x4, fixed_abs, tag = 'smem constant byte address 0x4 - core index']
  #allocation1 [shape = 'u32[144,128]{1,0:T(1,128)}', space=vmem, size = 0x12000, scoped, tag = 'internal scratch']
  %s0 = inlined_call_operand.vmem [shape: f32[128,32], index: 0, kind: input, shape index: {}]
  %s1 = inlined_call_operand.vmem [shape: f32[32,128], index: 1, kind: input, shape index: {}]
  %s2 = inlined_call_operand.hbm [shape: bf16[128,128], index: 2, kind: output, shape index: {}]
  %s3 = sld [smem:[#allocation0]]
  $region41: #{tpu_custom_call.1} parent=0
    _
  %s5 = ssub.s32 1, %s3
  %s6 = scalar_select 0, %s5, %s3
  $region1: #{tpu_custom_call.1} parent=0
    #allocation2 [shape = 'u8[32768]{0}', space=vmem, size = 0x8000, scoped, tag = 'output window, operand 0']
    #allocation3 [shape = 's32[2]{0}', space=sflag, size = 0x8, scoped, tag = 'scoped memory for tpu_custom_call.1']
    %7 = vsyncpa [#allocation3], 0
    %s8 = scalar_lea.sflag [#allocation3], 1
    %9 = vsyncpa %s8, 0
    loop: start=0, step=1, limit=4
    $region2: #{tpu_custom_call.1} parent=1 // loop_pre_header
      _
    $region3: #{tpu_custom_call.1} parent=1 // loop_header
      %s11 = sphi 0, %s15
      %p12 = scmp.ge.s32.totalorder %s11, 4
      %s21 = sphi 0, %s23
      %s24 = sphi 0, %s21
      %s25 = sphi 0, %s24
      %s41 = sphi 0, %s25
      %s45 = sphi 0, %s45
      %s47 = sphi 0, %s45
      %s48 = sphi 0, %s47
      %s62 = sphi 0, %s48
      %s68 = sphi 0, %s70
      %s71 = sphi 0, %s68
      %s72 = sphi 0, %s71
      %s88 = sphi 0, %s72
    $region4: #{tpu_custom_call.1} parent=1 // loop_header_branch
      %14 = sbr.rel (%p12) target = $region8
    $region5: #{tpu_custom_call.1} parent=1 // loop_body
      %s16 = ssub.s32 %s11, 1
      %s17 = ssub.s32 %s11, 2
      %s18 = sadd.s32 %s11, 1
      %s19 = ssub.s32 %s11, %s18
      %p20 = scmp.eq.s32.totalorder %s19, 0
      %s22 = sadd.s32 %s21, 1
      %s23 = scalar_select %p20, %s21, %s22
      %p26 = pneg %p20
      %p27 = scmp.eq.s32.totalorder %s11, 1
      %p28 = por %p26, %p27
      %p29 = scmp.ne.s32.totalorder %s21, %s24
      %p30 = scmp.eq.s32.totalorder %s11, 0
      %p31 = por %p29, %p30
      %p32 = scmp.ne.s32.totalorder %s21, %s24
      %p33 = scmp.eq.s32.totalorder %s16, 1
      %p34 = por %p32, %p33
      %p35 = scmp.ne.s32.totalorder %s24, %s25
      %p36 = scmp.eq.s32.totalorder %s16, 0
      %p37 = por %p35, %p36
      %p38 = scmp.ne.s32.totalorder %s24, %s25
      %p39 = scmp.eq.s32.totalorder %s17, 1
      %p40 = por %p38, %p39
      %p42 = scmp.ne.s32.totalorder %s25, %s41
      %p43 = scmp.eq.s32.totalorder %s17, 0
      %p44 = por %p42, %p43
      %s46 = sadd.s32 %s45, 1
      %p49 = scmp.eq.s32.totalorder %s11, 1
      %p50 = scmp.ne.s32.totalorder %s45, %s47
      %p51 = scmp.eq.s32.totalorder %s11, 0
      %p52 = por %p50, %p51
      %p53 = scmp.ne.s32.totalorder %s45, %s47
      %p54 = scmp.eq.s32.totalorder %s16, 1
      %p55 = por %p53, %p54
      %p56 = scmp.ne.s32.totalorder %s47, %s48
      %p57 = scmp.eq.s32.totalorder %s16, 0
      %p58 = por %p56, %p57
      %p59 = scmp.ne.s32.totalorder %s47, %s48
      %p60 = scmp.eq.s32.totalorder %s17, 1
      %p61 = por %p59, %p60
      %p63 = scmp.ne.s32.totalorder %s48, %s62
      %p64 = scmp.eq.s32.totalorder %s17, 0
      %p65 = por %p63, %p64
      %s66 = ssub.s32 %s11, %s18
      %p67 = scmp.eq.s32.totalorder %s66, 0
      %s69 = sadd.s32 %s68, 1
      %s70 = scalar_select %p67, %s68, %s69
      %p73 = pneg %p67
      %p74 = scmp.eq.s32.totalorder %s11, 1
      %p75 = por %p73, %p74
      %p76 = scmp.ne.s32.totalorder %s68, %s71
      %p77 = scmp.eq.s32.totalorder %s11, 0
      %p78 = por %p76, %p77
      %p79 = scmp.ne.s32.totalorder %s68, %s71
      %p80 = scmp.eq.s32.totalorder %s16, 1
      %p81 = por %p79, %p80
      %p82 = scmp.ne.s32.totalorder %s71, %s72
      %p83 = scmp.eq.s32.totalorder %s16, 0
      %p84 = por %p82, %p83
      %p85 = scmp.ne.s32.totalorder %s71, %s72
      %p86 = scmp.eq.s32.totalorder %s17, 1
      %p87 = por %p85, %p86
      %p89 = scmp.ne.s32.totalorder %s72, %s88
      %p90 = scmp.eq.s32.totalorder %s17, 0
      %p91 = por %p89, %p90
      %p92 = scmp.le.s32.totalorder 1, %s11
      %p93 = scmp.lt.s32.totalorder %s11, 3
      %p94 = pnand %p92, %p93
      %p95 = pneg %p94
      // Predicated region
      $region9: #{tpu_custom_call.1} parent=5 // pred_check
        _
      $region10: #{tpu_custom_call.1} parent=5 // pred_check_branch
        %97 = sbr.rel (%p94) target = $region12
      $region11: #{tpu_custom_call.1} parent=5 // pred_region
        %s98 = ssub.s32 %s11, 1
        // Predicated region
        $region13: #{tpu_custom_call.1} parent=11 // pred_check
          %p99 = pneg %p58
        $region14: #{tpu_custom_call.1} parent=11 // pred_check_branch
          %101 = sbr.rel (%p99) target = $region16
        $region15: #{tpu_custom_call.1} parent=11 // pred_region
          _
        $region16: #{tpu_custom_call.1} parent=11 // pred_fallthru
          _
      $region12: #{tpu_custom_call.1} parent=5 // pred_fallthru
        _
      %p102 = scmp.lt.s32.totalorder %s11, 2
      // Predicated region
      $region17: #{tpu_custom_call.1} parent=5 // pred_check
        %p103 = pneg %p102
      $region18: #{tpu_custom_call.1} parent=5 // pred_check_branch
        %105 = sbr.rel (%p103) target = $region20
      $region19: #{tpu_custom_call.1} parent=5 // pred_region
        // Predicated region
        $region21: #{tpu_custom_call.1} parent=19 // pred_check
          %p106 = pneg %p31
        $region22: #{tpu_custom_call.1} parent=19 // pred_check_branch
          %108 = sbr.rel (%p106) target = $region24
        $region23: #{tpu_custom_call.1} parent=19 // pred_region
          %s109 = smul.u32 8, %s11
          %p110 = scmp.lt.s32.totalorder %s109, 15
          %s111 = scalar_select %p110, %s109, 15
          %s112 = smul.addr %s111, 8
          %s113 = scalar_lea.vmem %s0, %s112
          %s114 = smul.u32 8, %s11
        $region24: #{tpu_custom_call.1} parent=19 // pred_fallthru
          _
      $region20: #{tpu_custom_call.1} parent=5 // pred_fallthru
        _
      %p115 = scmp.le.s32.totalorder 1, %s11
      %p116 = scmp.lt.s32.totalorder %s11, 3
      %p117 = pnand %p115, %p116
      %p118 = pneg %p117
      // Predicated region
      $region25: #{tpu_custom_call.1} parent=5 // pred_check
        _
      $region26: #{tpu_custom_call.1} parent=5 // pred_check_branch
        %120 = sbr.rel (%p117) target = $region28
      $region27: #{tpu_custom_call.1} parent=5 // pred_region
        %s121 = ssub.s32 %s11, 1
        %s122 = smul.u32 8, %s16
        %p123 = scmp.lt.s32.totalorder %s122, 15
        %s124 = scalar_select %p123, %s122, 15
        %s125 = smul.addr %s124, 8
        %s126 = scalar_lea.vmem %s0, %s125
        %p127 = pneg %p37
        %p128 = pneg %p34
        %p129 = pneg %p58
        %p130 = pneg %p55
        %p131 = pneg %p84
        %p132 = pneg %p81
        %s133 = sand.u32 %s71, 1
        %s134 = scalar_lea.sflag [#allocation3], %s133
        %s135 = sand.u32 %s71, 1
        %s136 = smul.addr %s135, 32
        %s137 = scalar_lea.vmem [#allocation2], %s136
        %s138 = smul.u32 8, %s16
        %p139 = scmp.lt.s32.totalorder %s138, 15
        %s140 = scalar_select %p139, %s138, 15
        %s141 = smul.addr %s140, 8
        %s142 = scalar_lea.vmem %s0, %s141
        %s143 = smul.u32 8, %s16
        %s144 = smul.u32 8, %s16
        %v145 = vld [vmem:[%s142] sm:$0xff]
        %v146 = vld [vmem:[%s142 + $0x8] sm:$0xff]
        %v147 = vld [vmem:[%s142 + $0x10] sm:$0xff]
        %v148 = vld [vmem:[%s142 + $0x18] sm:$0xff]
        %v149 = vld [vmem:[%s142 + $0x20] sm:$0xff]
        %v150 = vld [vmem:[%s142 + $0x28] sm:$0xff]
        %v151 = vld [vmem:[%s142 + $0x30] sm:$0xff]
        %v152 = vld [vmem:[%s142 + $0x38] sm:$0xff]
        %v153 = vld [vmem:[%s1] sm:$0xff]
        %v154 = vld [vmem:[%s1 + $0x8] sm:$0xff]
        %v155 = vld [vmem:[%s1 + $0x10] sm:$0xff]
        %v156 = vld [vmem:[%s1 + $0x18] sm:$0xff]
        %vm157 = vcmask 261120
        %v159 = vsel %vm157, %v145, 0
        %v162 = vsel %vm157, %v146, 0
        %v165 = vsel %vm157, %v147, 0
        %v168 = vsel %vm157, %v148, 0
        %v171 = vsel %vm157, %v149, 0
        %v174 = vsel %vm157, %v150, 0
        %v177 = vsel %vm157, %v151, 0
        %v180 = vsel %vm157, %v152, 0
        %182 = vmatprep.subr.mxu0 0.0
        %183 = vmatpush1.msra.mxu0 0.0
        %184 = vmatprep.subr.mxu0 0.0
        %185 = vmatpush1.msra.mxu0 0.0
        %186 = vmatprep.subr.mxu0 0.0
        %187 = vmatpush1.msra.mxu0 0.0
        %188 = vmatprep.subr.mxu0 0.0
        %189 = vmatpush1.msra.mxu0 0.0
        %190 = vmatprep.subr.mxu0 0.0
        %191 = vmatpush1.msra.mxu0 0.0
        %192 = vmatprep.subr.mxu0 0.0
        %193 = vmatpush1.msra.mxu0 0.0
        %194 = vmatprep.subr.mxu0 0.0
        %195 = vmatpush1.msra.mxu0 0.0
        %196 = vmatprep.subr.mxu0 0.0
        %197 = vmatpush1.msra.mxu0 0.0
        %198 = vmatprep.subr.mxu0 0.0
        %199 = vmatpush1.msra.mxu0 0.0
        %200 = vmatprep.subr.mxu0 0.0
        %201 = vmatpush1.msra.mxu0 0.0
        %202 = vmatprep.subr.mxu0 0.0
        %203 = vmatpush1.msra.mxu0 0.0
        %204 = vmatprep.subr.mxu0 0.0
        %205 = vmatpush1.msra.mxu0 0.0
        %206 = vmatprep.subr.mxu0 0.0
        %207 = vmatpush1.msra.mxu0 %v156
        %208 = vmatprep.subr.mxu0 0.0
        %209 = vmatpush1.msra.mxu0 %v155
        %210 = vmatprep.subr.mxu0 0.0
        %211 = vmatpush1.msra.mxu0 %v154
        %212 = vmatprep.subr.mxu0 0.0
        %213 = vmatpush1.msra.mxu0 %v153
        %214 = vmatprep.subr.mxu0 0.0
        %215 = vmatpush2.msra.mxu0 0.0
        %216 = vmatprep.subr.mxu0 0.0
        %217 = vmatpush2.msra.mxu0 0.0
        %218 = vmatprep.subr.mxu0 0.0
        %219 = vmatpush2.msra.mxu0 0.0
        %220 = vmatprep.subr.mxu0 0.0
        %221 = vmatpush2.msra.mxu0 0.0
        %222 = vmatprep.subr.mxu0 0.0
        %223 = vmatpush2.msra.mxu0 0.0
        %224 = vmatprep.subr.mxu0 0.0
        %225 = vmatpush2.msra.mxu0 0.0
        %226 = vmatprep.subr.mxu0 0.0
        %227 = vmatpush2.msra.mxu0 0.0
        %228 = vmatprep.subr.mxu0 0.0
        %229 = vmatpush2.msra.mxu0 0.0
        %230 = vmatprep.subr.mxu0 0.0
        %231 = vmatpush2.msra.mxu0 0.0
        %232 = vmatprep.subr.mxu0 0.0
        %233 = vmatpush2.msra.mxu0 0.0
        %234 = vmatprep.subr.mxu0 0.0
        %235 = vmatpush2.msra.mxu0 0.0
        %236 = vmatprep.subr.mxu0 0.0
        %237 = vmatpush2.msra.mxu0 0.0
        %238 = vmatprep.subr.mxu0 0.0
        %239 = vmatpush2.msra.mxu0 0.0
        %240 = vmatprep.subr.mxu0 0.0
        %241 = vmatpush2.msra.mxu0 0.0
        %242 = vmatprep.subr.mxu0 0.0
        %243 = vmatpush2.msra.mxu0 0.0
        %244 = vmatprep.subr.mxu0 0.0
        %245 = vmatpush2.msra.mxu0 0.0
        %246 = vmatprep.mubr.f32.mxu0 0.0
        %247 = vmatmul.mubr.f32.gmra.mxu0 %v159
        %v248 = vpop.f32.mrf.mxu0
        %v249 = vadd.f32 0.0, %v248
        %v250 = vpop.f32.mrf.mxu0
        %251 = vmatprep.mubr.f32.mxu0 0.0
        %252 = vmatmul.mubr.f32.gmra.mxu0 %v162
        %v253 = vpop.f32.mrf.mxu0
        %v254 = vadd.f32 0.0, %v253
        %v255 = vpop.f32.mrf.mxu0
        %256 = vmatprep.mubr.f32.mxu0 0.0
        %257 = vmatmul.mubr.f32.gmra.mxu0 %v165
        %v258 = vpop.f32.mrf.mxu0
        %v259 = vadd.f32 0.0, %v258
        %v260 = vpop.f32.mrf.mxu0
        %261 = vmatprep.mubr.f32.mxu0 0.0
        %262 = vmatmul.mubr.f32.gmra.mxu0 %v168
        %v263 = vpop.f32.mrf.mxu0
        %v264 = vadd.f32 0.0, %v263
        %v265 = vpop.f32.mrf.mxu0
        %266 = vmatprep.mubr.f32.mxu0 0.0
        %267 = vmatmul.mubr.f32.gmra.mxu0 %v171
        %v268 = vpop.f32.mrf.mxu0
        %v269 = vadd.f32 0.0, %v268
        %v270 = vpop.f32.mrf.mxu0
        %271 = vmatprep.mubr.f32.mxu0 0.0
        %272 = vmatmul.mubr.f32.gmra.mxu0 %v174
        %v273 = vpop.f32.mrf.mxu0
        %v274 = vadd.f32 0.0, %v273
        %v275 = vpop.f32.mrf.mxu0
        %276 = vmatprep.mubr.f32.mxu0 0.0
        %277 = vmatmul.mubr.f32.gmra.mxu0 %v177
        %v278 = vpop.f32.mrf.mxu0
        %v279 = vadd.f32 0.0, %v278
        %v280 = vpop.f32.mrf.mxu0
        %281 = vmatprep.mubr.f32.mxu0 0.0
        %282 = vmatmul.mubr.f32.gmra.mxu0 %v180
        %v283 = vpop.f32.mrf.mxu0
        %v284 = vadd.f32 0.0, %v283
        %v285 = vpop.f32.mrf.mxu0
        %286 = vdwg.mxu0
        %v287 = vpack.c.bf16 %v254, %v249
        %v288 = vpack.c.bf16 %v264, %v259
        %v289 = vpack.c.bf16 %v274, %v269
        %v290 = vpack.c.bf16 %v284, %v279
        %v295 = vunpack.c.l.b16 %v287
        %v296 = vunpack.c.h.b16 %v287
        %v297 = vunpack.c.l.b16 %v288
        %v298 = vunpack.c.h.b16 %v288
        %v299 = vunpack.c.l.b16 %v289
        %v300 = vunpack.c.h.b16 %v289
        %v301 = vunpack.c.l.b16 %v290
        %v302 = vunpack.c.h.b16 %v290
        %v303 = vpack.c.b16 %v295, %v295
        %v304 = vpack.c.b16 %v296, %v296
        %v305 = vpack.c.b16 %v297, %v297
        %v306 = vpack.c.b16 %v298, %v298
        %v307 = vpack.c.b16 %v299, %v299
        %v308 = vpack.c.b16 %v300, %v300
        %v309 = vpack.c.b16 %v301, %v301
        %v310 = vpack.c.b16 %v302, %v302
        %319 = vst [vmem:[%s137] sm:$0xf] %v303
        %320 = vst [vmem:[%s137 + $0x4] sm:$0xf] %v304
        %321 = vst [vmem:[%s137 + $0x8] sm:$0xf] %v305
        %322 = vst [vmem:[%s137 + $0xc] sm:$0xf] %v306
        %323 = vst [vmem:[%s137 + $0x10] sm:$0xf] %v307
        %324 = vst [vmem:[%s137 + $0x14] sm:$0xf] %v308
        %325 = vst [vmem:[%s137 + $0x18] sm:$0xf] %v309
        %326 = vst [vmem:[%s137 + $0x1c] sm:$0xf] %v310
        %s327 = sand.u32 %s71, 1
        %s328 = scalar_lea.sflag [#allocation3], %s327
        %s329 = sand.u32 %s71, 1
        %s330 = smul.addr %s329, 32
        %s331 = scalar_lea.vmem [#allocation2], %s330
        // Predicated region
        $region29: #{tpu_custom_call.1} parent=27 // pred_check
          %p332 = pneg %p81
        $region30: #{tpu_custom_call.1} parent=27 // pred_check_branch
          %334 = sbr.rel (%p332) target = $region32
        $region31: #{tpu_custom_call.1} parent=27 // pred_region
          %s335 = smul.u32 8, %s16
          %s337 = ssub.s32 512, 512
          %338 = vsyncadd %s328, %s337
          %s339 = smul.addr %s335, 64
          %s340 = scalar_lea.hbm %s2, %s339
          %s341 = sshll.u32 %s331, 4
          %s342 = int_to_ptr.vmem [resolvable:$true] %s341
          %347 = dma.vmem_to_hbm [thread:$0]  %s342, 512, %s340, %s328, 64, 64, 4
        $region32: #{tpu_custom_call.1} parent=27 // pred_fallthru
          _
      $region28: #{tpu_custom_call.1} parent=5 // pred_fallthru
        _
      %p348 = scmp.le.s32.totalorder 2, %s11
      // Predicated region
      $region33: #{tpu_custom_call.1} parent=5 // pred_check
        %p349 = pneg %p348
      $region34: #{tpu_custom_call.1} parent=5 // pred_check_branch
        %351 = sbr.rel (%p349) target = $region36
      $region35: #{tpu_custom_call.1} parent=5 // pred_region
        %s352 = ssub.s32 %s11, 2
        // Predicated region
        $region37: #{tpu_custom_call.1} parent=35 // pred_check
          %p353 = pneg %p87
        $region38: #{tpu_custom_call.1} parent=35 // pred_check_branch
          %355 = sbr.rel (%p353) target = $region40
        $region39: #{tpu_custom_call.1} parent=35 // pred_region
          %s356 = sand.u32 %s72, 1
          %s357 = scalar_lea.sflag [#allocation3], %s356
          %s358 = sand.u32 %s72, 1
          %s359 = smul.addr %s358, 32
          %s360 = scalar_lea.vmem [#allocation2], %s359
          %361 = dma.done %s357, 512
        $region40: #{tpu_custom_call.1} parent=35 // pred_fallthru
          _
      $region36: #{tpu_custom_call.1} parent=5 // pred_fallthru
        _
    $region6: #{tpu_custom_call.1} parent=1 // loop_footer
      %s15 = sadd.s32 1, %s11
    $region7: #{tpu_custom_call.1} parent=1 // loop_footer_branch
      %10 = sbr.rel target = $region3
    $region8: #{tpu_custom_call.1} parent=1 // loop_exit
      _
    %362 = vsyncpa [#allocation3], 1
    %s363 = scalar_lea.sflag [#allocation3], 1
    %364 = vsyncpa %s363, 1

</llo_original>
